<compile_context>
chip_gen: v7x
topology: tpu7x:2x2x1
jax: 0.10.0
libtpu: 0.0.40
codegen_flags: <defaults>
</compile_context>

<pallas_src>
import functools

import jax
import jax.numpy as jnp
from jax.experimental import pallas as pl
from jax.experimental.pallas import tpu as pltpu


def _cdiv(a, b):
    return (a + b - 1) // b


def _round_up(a, b):
    return _cdiv(a, b) * b


def _iou_loss_kernel(x_ref, t_ref, ones_ref, o_ref, inter_acc, row_acc, *,
                     n_total, c_total, block_n, block_c, use_mxu, mask_cols):
    i = pl.program_id(0)          # row tile  ("parallel")
    j = pl.program_id(1)          # C block   ("arbitrary" reduction, innermost)

    @pl.when(j == 0)
    def _():
        inter_acc[...] = jnp.zeros_like(inter_acc)
        row_acc[...] = jnp.zeros_like(row_acc)

    tn, tc = x_ref.shape

    # sigmoid(x) == 0.5 * tanh(x / 2) + 0.5 : a single EUP op per element.
    x = x_ref[...].astype(jnp.float32)
    p = 0.5 * jnp.tanh(0.5 * x) + 0.5

    col = j * block_c + jax.lax.broadcasted_iota(jnp.int32, (tn, tc), 1)
    if mask_cols:
        # Ragged last C block: padded columns hold garbage -> select, not multiply.
        p = jnp.where(col < c_total, p, 0.0)

    # intersection[n] = p[n, targets[n]] : masked row reduce, no float one-hot.
    hit = col == t_ref[...]
    inter_acc[...] += jnp.sum(jnp.where(hit, p, 0.0), axis=1, keepdims=True)

    if use_mxu:
        # Row sums on the otherwise-idle MXU: every output lane holds sum_c p.
        row_acc[...] += jnp.dot(p, ones_ref[...], preferred_element_type=jnp.float32)
    else:
        row_acc[...] += jnp.sum(p, axis=1, keepdims=True)

    @pl.when(j == pl.num_programs(1) - 1)
    def _():
        inter = inter_acc[...]
        row_sum = row_acc[:, 0:1]
        union = row_sum + 1.0 - inter
        iou = (inter + 1e-6) / (union + 1e-6)
        # Mask rows past the true N (ragged last row tile) with a SELECT so
        # NaN/garbage from padded rows is dropped, never propagated.
        row = i * block_n + jax.lax.broadcasted_iota(jnp.int32, (tn, 1), 0)
        iou = jnp.where(row < n_total, iou, 0.0)
        # Lane/sublane-dense slab -> plain unmasked vector store.
        o_ref[...] = jnp.full(o_ref.shape, jnp.sum(iou), dtype=jnp.float32)


def iou_loss(inputs, targets, *, stream_bf16=False):
    """inputs: (N, C) float logits (any float dtype); targets: (N,) int class ids."""
    assert inputs.ndim == 2, "expected (N, C) logits"
    assert targets.ndim == 1, "expected (N,) class indices"
    # TODO(synk): the PyTorch module also accepts already-2D `targets`; only the
    # standard 1-D class-index targets path is implemented here.
    if stream_bf16 and inputs.dtype == jnp.float32:
        # Optional HBM-traffic halving for v5e/v6e (slightly changes numerics).
        inputs = inputs.astype(jnp.bfloat16)

    n, c = inputs.shape
    t2d = targets.astype(jnp.int32).reshape(n, 1)

    itemsize = inputs.dtype.itemsize
    lane = 128
    sublane_align = 8 * max(1, 4 // itemsize)          # f32: 8, bf16: 16, int8: 32
    n_padded = _round_up(n, sublane_align)

    # C tiling: single block when C is modest (block dim == full dim is always
    # layout-legal); otherwise 1024-wide blocks (multiple of 128) with a masked
    # ragged tail. Bounds the whole-tile f32 intermediates.
    c_block_cap = 1024
    tc = c if c <= 2 * c_block_cap else c_block_cap
    num_c_blocks = _cdiv(c, tc)
    mask_cols = (c % tc) != 0
    use_mxu = tc >= 128

    # Row-tile size derived from a byte budget (not a row cap):
    #   2*tc*itemsize  double-buffered native-dtype logits tile
    #   12*tc          whole-tile f32 sigmoid/select intermediates (generous)
    #   2*128*4        lane-padded (tn,1) int32 targets, double buffered
    #   2*128*4        f32 accumulators (intersection + row-sum), lane padded
    per_row = 2 * tc * itemsize + 12 * tc + 4 * lane * 4
    fixed = 2 * 1024 * 1024                      # ones operand, output slab, margin
    budget = 24 * 1024 * 1024
    tn = max(sublane_align,
             ((budget - fixed) // per_row) // sublane_align * sublane_align)
    tn = min(tn, n_padded)
    # Prefer >= 2 row tiles (lets v7x shard the parallel axis across its two
    # TensorCores) as long as each tile still streams >= ~1 MiB.
    if n * c * itemsize >= 2 * 1024 * 1024:
        tn = min(tn, _round_up(_cdiv(n_padded, 2), sublane_align))
    num_tiles = _cdiv(n, tn)

    ones = jnp.ones((tc, lane), jnp.float32)     # MXU row-sum operand

    kernel = functools.partial(
        _iou_loss_kernel, n_total=n, c_total=c, block_n=tn, block_c=tc,
        use_mxu=use_mxu, mask_cols=mask_cols)

    partials = pl.pallas_call(
        kernel,
        grid=(num_tiles, num_c_blocks),
        in_specs=[
            pl.BlockSpec((tn, tc), lambda i, j: (i, j)),    # logits (native dtype)
            pl.BlockSpec((tn, 1), lambda i, j: (i, 0)),     # class indices
            pl.BlockSpec((tc, lane), lambda i, j: (0, 0)),  # ones (constant block)
        ],
        out_specs=pl.BlockSpec((1, 8, lane), lambda i, j: (i, 0, 0)),
        out_shape=jax.ShapeDtypeStruct((num_tiles, 8, lane), jnp.float32),
        scratch_shapes=[
            pltpu.VMEM((tn, 1), jnp.float32),                        # intersection acc
            pltpu.VMEM((tn, lane if use_mxu else 1), jnp.float32),   # row-sum acc
        ],
        compiler_params=pltpu.CompilerParams(
            dimension_semantics=("parallel", "arbitrary"),
            vmem_limit_bytes=40 * 1024 * 1024),
        cost_estimate=pl.CostEstimate(
            flops=8 * n * c,
            transcendentals=n * c,
            bytes_accessed=n * c * itemsize + n * 4 + num_tiles * 8 * lane * 4),
    )(inputs, t2d, ones)

    # Tiny final reduction over per-tile partial sums in plain JAX.
    return 1.0 - jnp.sum(partials[:, 0, 0]) / jnp.float32(n)


def _iou_loss_ref(inputs, targets):
    """Pure-JAX reference mirroring the PyTorch forward exactly."""
    p = jax.nn.sigmoid(inputs.astype(jnp.float32))
    t = targets.reshape(1, -1)                                   # unsqueeze(0)
    onehot = jax.nn.one_hot(t, p.shape[1], dtype=jnp.float32)    # (1, N, C)
    inter = (p * onehot).sum(axis=(0, 2))
    union = (p + onehot).sum(axis=(0, 2)) - inter
    iou = (inter + 1e-6) / (union + 1e-6)
    return 1.0 - iou.mean()


if __name__ == "__main__":
    key = jax.random.PRNGKey(0)
    k1, k2, k3, k4, k5, k6 = jax.random.split(key, 6)

    # Small f32 case (single tile, VPU-only reduction path).
    x1 = jax.random.normal(k1, (8, 16), dtype=jnp.float32)
    t1 = jax.random.randint(k2, (8,), 0, 16, dtype=jnp.int32)
    l1 = iou_loss(x1, t1)
    jax.block_until_ready(l1)
    r1 = _iou_loss_ref(x1, t1)
    assert jnp.allclose(l1, r1, atol=1e-4), (l1, r1)

    # bf16 streaming, ragged last row tile, MXU row-sum path.
    x2 = jax.random.normal(k3, (300, 128), dtype=jnp.float32).astype(jnp.bfloat16)
    t2 = jax.random.randint(k4, (300,), 0, 128, dtype=jnp.int32)
    l2 = iou_loss(x2, t2)
    jax.block_until_ready(l2)
    r2 = _iou_loss_ref(x2, t2)
    assert jnp.allclose(l2, r2, atol=1e-4), (l2, r2)

    # Wide-C case: blocked C axis with a masked ragged last C block.
    x3 = jax.random.normal(k5, (64, 2560), dtype=jnp.float32)
    t3 = jax.random.randint(k6, (64,), 0, 2560, dtype=jnp.int32)
    l3 = iou_loss(x3, t3)
    jax.block_until_ready(l3)
    r3 = _iou_loss_ref(x3, t3)
    assert jnp.allclose(l3, r3, atol=1e-4), (l3, r3)

    print("KERNEL_OK")
</pallas_src>

<mosaic_0001>
module attributes {stable_mosaic.version = 11 : i64} {
  func.func @_iou_loss_kernel(%arg0: i32, %arg1: i32, %arg2: memref<8x16xf32, #tpu.memory_space<vmem>>, %arg3: memref<8x1xi32, #tpu.memory_space<vmem>>, %arg4: memref<16x128xf32, #tpu.memory_space<vmem>>, %arg5: memref<1x8x128xf32, #tpu.memory_space<vmem>>, %arg6: memref<8x1xf32, #tpu.memory_space<vmem>>, %arg7: memref<8x1xf32, #tpu.memory_space<vmem>>) attributes {dimension_semantics = [#tpu.dimension_semantics<parallel>, #tpu.dimension_semantics<arbitrary>], iteration_bounds = array<i64: 1, 1>, scalar_prefetch = 0 : i64, scratch_operands = 2 : i64, tpu.core_type = #tpu.core_type<tc>, window_params = [{transform_indices = @transform_0, window_bounds = array<i64: 8, 16>}, {transform_indices = @transform_1, window_bounds = array<i64: 8, 1>}, {pipeline_mode = #tpu.pipeline_mode<synchronous>, transform_indices = @transform_2, window_bounds = array<i64: 16, 128>}, {transform_indices = @transform_3, window_bounds = array<i64: 1, 8, 128>}]} {
    %c0_i32 = arith.constant 0 : i32
    %0 = arith.cmpi eq, %arg1, %c0_i32 : i32
    %1 = arith.extui %0 : i1 to i32
    %c0_i32_0 = arith.constant 0 : i32
    %2 = arith.cmpi ne, %1, %c0_i32_0 : i32
    scf.if %2 {
      %cst_19 = arith.constant 0.000000e+00 : f32
      %33 = vector.broadcast %cst_19 : f32 to vector<8x1xf32>
      %c0_20 = arith.constant 0 : index
      %c0_21 = arith.constant 0 : index
      %34 = vector.load %arg6[%c0_20, %c0_21] : memref<8x1xf32, #tpu.memory_space<vmem>>, vector<8x1xf32>
      tpu.vector_store %arg6[%c0_20, %c0_21], %33 {strides = array<i32>} : memref<8x1xf32, #tpu.memory_space<vmem>>, vector<8x1xf32>,
      %cst_22 = arith.constant 0.000000e+00 : f32
      %35 = vector.broadcast %cst_22 : f32 to vector<8x1xf32>
      %c0_23 = arith.constant 0 : index
      %c0_24 = arith.constant 0 : index
      %36 = vector.load %arg7[%c0_23, %c0_24] : memref<8x1xf32, #tpu.memory_space<vmem>>, vector<8x1xf32>
      tpu.vector_store %arg7[%c0_23, %c0_24], %35 {strides = array<i32>} : memref<8x1xf32, #tpu.memory_space<vmem>>, vector<8x1xf32>,
    } else {
    }
    %c0 = arith.constant 0 : index
    %c0_1 = arith.constant 0 : index
    %3 = vector.load %arg2[%c0, %c0_1] : memref<8x16xf32, #tpu.memory_space<vmem>>, vector<8x16xf32>
    %cst = arith.constant 5.000000e-01 : f32
    %4 = vector.broadcast %cst : f32 to vector<8x16xf32>
    %5 = arith.mulf %4, %3 : vector<8x16xf32>
    %6 = math.tanh %5 : vector<8x16xf32>
    %cst_2 = arith.constant 5.000000e-01 : f32
    %7 = vector.broadcast %cst_2 : f32 to vector<8x16xf32>
    %8 = arith.mulf %7, %6 : vector<8x16xf32>
    %cst_3 = arith.constant 5.000000e-01 : f32
    %9 = vector.broadcast %cst_3 : f32 to vector<8x16xf32>
    %10 = arith.addf %8, %9 : vector<8x16xf32>
    %c16_i32 = arith.constant 16 : i32
    %11 = arith.muli %arg1, %c16_i32 : i32
    %12 = tpu.iota {dimensions = array<i32: 1>} : vector<8x16xi32>
    %13 = vector.broadcast %11 : i32 to vector<8x16xi32>
    %14 = arith.addi %13, %12 : vector<8x16xi32>
    %c0_4 = arith.constant 0 : index
    %c0_5 = arith.constant 0 : index
    %15 = vector.load %arg3[%c0_4, %c0_5] : memref<8x1xi32, #tpu.memory_space<vmem>>, vector<8x1xi32>
    %16 = vector.broadcast %15 : vector<8x1xi32> to vector<8x16xi32>
    %17 = arith.cmpi eq, %14, %16 : vector<8x16xi32>
    %c0_6 = arith.constant 0 : index
    %c0_7 = arith.constant 0 : index
    %18 = vector.load %arg6[%c0_6, %c0_7] : memref<8x1xf32, #tpu.memory_space<vmem>>, vector<8x1xf32>
    %cst_8 = arith.constant 0.000000e+00 : f32
    %19 = vector.broadcast %cst_8 : f32 to vector<8x16xf32>
    %20 = arith.select %17, %10, %19 : vector<8x16xi1>, vector<8x16xf32>
    %cst_9 = arith.constant dense<0.000000e+00> : vector<8xf32>
    %21 = vector.multi_reduction <add>, %20, %cst_9 [1] : vector<8x16xf32> to vector<8xf32>
    %22 = vector.shape_cast %21 : vector<8xf32> to vector<8x1xf32>
    %23 = arith.addf %18, %22 : vector<8x1xf32>
    %c0_10 = arith.constant 0 : index
    %c0_11 = arith.constant 0 : index
    %24 = vector.load %arg6[%c0_10, %c0_11] : memref<8x1xf32, #tpu.memory_space<vmem>>, vector<8x1xf32>
    tpu.vector_store %arg6[%c0_10, %c0_11], %23 {strides = array<i32>} : memref<8x1xf32, #tpu.memory_space<vmem>>, vector<8x1xf32>,
    %c0_12 = arith.constant 0 : index
    %c0_13 = arith.constant 0 : index
    %25 = vector.load %arg7[%c0_12, %c0_13] : memref<8x1xf32, #tpu.memory_space<vmem>>, vector<8x1xf32>
    %cst_14 = arith.constant dense<0.000000e+00> : vector<8xf32>
    %26 = vector.multi_reduction <add>, %10, %cst_14 [1] : vector<8x16xf32> to vector<8xf32>
    %27 = vector.shape_cast %26 : vector<8xf32> to vector<8x1xf32>
    %28 = arith.addf %25, %27 : vector<8x1xf32>
    %c0_15 = arith.constant 0 : index
    %c0_16 = arith.constant 0 : index
    %29 = vector.load %arg7[%c0_15, %c0_16] : memref<8x1xf32, #tpu.memory_space<vmem>>, vector<8x1xf32>
    tpu.vector_store %arg7[%c0_15, %c0_16], %28 {strides = array<i32>} : memref<8x1xf32, #tpu.memory_space<vmem>>, vector<8x1xf32>,
    %c0_i32_17 = arith.constant 0 : i32
    %30 = arith.cmpi eq, %arg1, %c0_i32_17 : i32
    %31 = arith.extui %30 : i1 to i32
    %c0_i32_18 = arith.constant 0 : i32
    %32 = arith.cmpi ne, %31, %c0_i32_18 : i32
    scf.if %32 {
      %c0_19 = arith.constant 0 : index
      %c0_20 = arith.constant 0 : index
      %33 = vector.load %arg6[%c0_19, %c0_20] : memref<8x1xf32, #tpu.memory_space<vmem>>, vector<8x1xf32>
      %c0_21 = arith.constant 0 : index
      %c0_22 = arith.constant 0 : index
      %34 = vector.load %arg7[%c0_21, %c0_22] : memref<8x1xf32, #tpu.memory_space<vmem>>, vector<8x1xf32>
      %cst_23 = arith.constant 1.000000e+00 : f32
      %35 = vector.broadcast %cst_23 : f32 to vector<8x1xf32>
      %36 = arith.addf %34, %35 : vector<8x1xf32>
      %37 = arith.subf %36, %33 : vector<8x1xf32>
      %cst_24 = arith.constant 9.99999997E-7 : f32
      %38 = vector.broadcast %cst_24 : f32 to vector<8x1xf32>
      %39 = arith.addf %33, %38 : vector<8x1xf32>
      %cst_25 = arith.constant 9.99999997E-7 : f32
      %40 = vector.broadcast %cst_25 : f32 to vector<8x1xf32>
      %41 = arith.addf %37, %40 : vector<8x1xf32>
      %42 = arith.divf %39, %41 : vector<8x1xf32>
      %c8_i32 = arith.constant 8 : i32
      %43 = arith.muli %arg0, %c8_i32 : i32
      %44 = tpu.iota {dimensions = array<i32: 0>} : vector<8x1xi32>
      %45 = vector.broadcast %43 : i32 to vector<8x1xi32>
      %46 = arith.addi %45, %44 : vector<8x1xi32>
      %c8_i32_26 = arith.constant 8 : i32
      %47 = vector.broadcast %c8_i32_26 : i32 to vector<8x1xi32>
      %48 = arith.cmpi slt, %46, %47 : vector<8x1xi32>
      %cst_27 = arith.constant 0.000000e+00 : f32
      %49 = vector.broadcast %cst_27 : f32 to vector<8x1xf32>
      %50 = arith.select %48, %42, %49 : vector<8x1xi1>, vector<8x1xf32>
      %51 = vector.shape_cast %50 : vector<8x1xf32> to vector<1x8x1xf32>
      %cst_28 = arith.constant dense<0.000000e+00> : vector<1xf32>
      %52 = vector.multi_reduction <add>, %51, %cst_28 [1, 2] : vector<1x8x1xf32> to vector<1xf32>
      %53 = vector.shape_cast %52 : vector<1xf32> to vector<1x1x1xf32>
      %54 = vector.extract %53[0, 0, 0] : f32 from vector<1x1x1xf32>
      %55 = vector.broadcast %54 : f32 to vector<1x8x128xf32>
      %c0_29 = arith.constant 0 : index
      %c0_30 = arith.constant 0 : index
      %c0_31 = arith.constant 0 : index
      %56 = vector.load %arg5[%c0_29, %c0_30, %c0_31] : memref<1x8x128xf32, #tpu.memory_space<vmem>>, vector<1x8x128xf32>
      tpu.vector_store %arg5[%c0_29, %c0_30, %c0_31], %55 {strides = array<i32>} : memref<1x8x128xf32, #tpu.memory_space<vmem>>, vector<1x8x128xf32>,
    } else {
    }
    return
  }
  func.func @transform_0(%arg0: i32, %arg1: i32) -> (i32, i32) {
    %c0_i32 = arith.constant 0 : i32
    return %arg0, %arg1 : i32, i32
  }
  func.func @transform_1(%arg0: i32, %arg1: i32) -> (i32, i32) {
    %c0_i32 = arith.constant 0 : i32
    %c0_i32_0 = arith.constant 0 : i32
    return %arg0, %c0_i32 : i32, i32
  }
  func.func @transform_2(%arg0: i32, %arg1: i32) -> (i32, i32) {
    %c0_i32 = arith.constant 0 : i32
    %c0_i32_0 = arith.constant 0 : i32
    %c0_i32_1 = arith.constant 0 : i32
    return %c0_i32, %c0_i32_0 : i32, i32
  }
  func.func @transform_3(%arg0: i32, %arg1: i32) -> (i32, i32, i32) {
    %c0_i32 = arith.constant 0 : i32
    %c0_i32_0 = arith.constant 0 : i32
    %c0_i32_1 = arith.constant 0 : i32
    return %arg0, %c0_i32, %c0_i32_0 : i32, i32, i32
  }
}

</mosaic_0001>

<llo_original>
// kernel: tpu_custom_call.1
$region0: #{tpu_custom_call.1}
  #allocation0 [shape = 'u32[]', space=smem, size = 0x4, offset = 0x4, fixed_abs, tag = 'smem constant byte address 0x4 - core index']
  #allocation1 [shape = 'u32[144,128]{1,0:T(1,128)}', space=vmem, size = 0x12000, scoped, tag = 'internal scratch']
  #allocation2 [shape = 'f32[8,1]{1,0:T(8,128)}', space=vmem, size = 0x1000, scoped, tag = 'scratch operand']
  #allocation3 [shape = 'f32[8,1]{1,0:T(8,128)}', space=vmem, size = 0x1000, scoped, tag = 'scratch operand']
  %s0 = inlined_call_operand.hbm [shape: f32[8,16], index: 0, kind: input, shape index: {}]
  %s1 = inlined_call_operand.vmem [shape: s32[8,1], index: 1, kind: input, shape index: {}]
  %s2 = inlined_call_operand.vmem [shape: f32[16,128], index: 2, kind: input, shape index: {}]
  %s3 = inlined_call_operand.hbm [shape: f32[1,8,128], index: 3, kind: output, shape index: {}]
  %s4 = sld [smem:[#allocation0]]
  $region34: #{tpu_custom_call.1} parent=0
    _
  %s6 = ssub.s32 1, %s4
  %s7 = scalar_select 0, %s6, %s4
  $region1: #{tpu_custom_call.1} parent=0
    #allocation4 [shape = 'u8[4096]{0}', space=vmem, size = 0x1000, scoped, tag = 'input window, operand 0, single buffered']
    #allocation5 [shape = 's32[1]{0}', space=sflag, size = 0x4, scoped, tag = 'scoped memory for tpu_custom_call.1']
    #allocation6 [shape = 's32[1]{0}', space=sflag, size = 0x4, scoped, tag = 'scoped memory for tpu_custom_call.1']
    #allocation7 [shape = 'u8[4096]{0}', space=vmem, size = 0x1000, scoped, tag = 'output window, operand 0, single buffered']
    %8 = vsyncpa [#allocation5], 0
    %9 = vsyncpa [#allocation6], 0
    // Predicated region
    $region2: #{tpu_custom_call.1} parent=1 // pred_check
      _
    $region3: #{tpu_custom_call.1} parent=1 // pred_check_branch
      %11 = sbr.rel (0) target = $region5
    $region4: #{tpu_custom_call.1} parent=1 // pred_region
      %s13 = ssub.s32 128, 128
      %14 = vsyncadd [#allocation5], %s13
      %s16 = sshll.u32 [#allocation4], 4
      %s17 = int_to_ptr.vmem [resolvable:$true] %s16
      %19 = dma.hbm_to_vmem [thread:$0]  %s0, 128, %s17, [#allocation5]
    $region5: #{tpu_custom_call.1} parent=1 // pred_fallthru
      _
    // Predicated region
    $region6: #{tpu_custom_call.1} parent=1 // pred_check
      _
    $region7: #{tpu_custom_call.1} parent=1 // pred_check_branch
      %21 = sbr.rel (0) target = $region9
    $region8: #{tpu_custom_call.1} parent=1 // pred_region
      _
    $region9: #{tpu_custom_call.1} parent=1 // pred_fallthru
      _
    // Predicated region
    $region10: #{tpu_custom_call.1} parent=1 // pred_check
      _
    $region11: #{tpu_custom_call.1} parent=1 // pred_check_branch
      %23 = sbr.rel (0) target = $region13
    $region12: #{tpu_custom_call.1} parent=1 // pred_region
      _
    $region13: #{tpu_custom_call.1} parent=1 // pred_fallthru
      _
    // Predicated region
    $region14: #{tpu_custom_call.1} parent=1 // pred_check
      _
    $region15: #{tpu_custom_call.1} parent=1 // pred_check_branch
      %25 = sbr.rel (0) target = $region17
    $region16: #{tpu_custom_call.1} parent=1 // pred_region
      %26 = dma.done [#allocation5], 128
    $region17: #{tpu_custom_call.1} parent=1 // pred_fallthru
      _
    %p27 = scmp.eq.s32.totalorder 0, 0
    // Predicated region
    $region18: #{tpu_custom_call.1} parent=1 // pred_check
      %p28 = pneg %p27
    $region19: #{tpu_custom_call.1} parent=1 // pred_check_branch
      %30 = sbr.rel (%p28) target = $region21
    $region20: #{tpu_custom_call.1} parent=1 // pred_region
      %vm31 = vcmask 7168
      %32 = vst.msk [vmem:[#allocation2] sm:$0xff] %vm31, 0.0
      %33 = vst.msk [vmem:[#allocation3] sm:$0xff] %vm31, 0.0
    $region21: #{tpu_custom_call.1} parent=1 // pred_fallthru
      _
    %v34 = vld [vmem:[#allocation4] sm:$0xff]
    %v35 = vmul.f32 %v34, 0.5
    %v36 = vtanh.pop %v35
    %v37 = vmul.f32 %v36, 0.5
    %v38 = vadd.f32 %v37, 0.5
    %s39 = smul.u32 0, 16
    %v40 = vlaneseq
    %v41 = vand.u32 %v40, 127
    %v42 = vstv %s39
    %v43 = vadd.s32 %v42, %v41
    %v44 = vld [vmem:[%s1] sm:$0xff]
    %45 = vset.pattern.permute.xlu0 0
    %46 = vperm.xlu0 %45, %v44
    %v47 = vpop.permute.xlu0 %46
    %vm48 = vcmp.eq.s32.totalorder %v43, %v47
    %v49 = vld [vmem:[#allocation2] sm:$0xff]
    %v50 = vsel %vm48, %v38, 0.0
    %vm51 = vcmask 130048
    %v52 = vsel %vm51, %v50, 0.0
    %53 = vadd.xlane.f32.xlu0 %v52
    %v54 = vpop.xlane.xlu0 %53
    %v55 = vadd.f32 %v49, %v54
    %vm56 = vcmask 7168
    %57 = vst.msk [vmem:[#allocation2] sm:$0xff] %vm56, %v55
    %v58 = vld [vmem:[#allocation3] sm:$0xff]
    %v59 = vsel %vm51, %v38, 0.0
    %60 = vadd.xlane.f32.xlu0 %v59
    %v61 = vpop.xlane.xlu0 %60
    %v62 = vadd.f32 %v58, %v61
    %63 = vst.msk [vmem:[#allocation3] sm:$0xff] %vm56, %v62
    // Predicated region
    $region22: #{tpu_custom_call.1} parent=1 // pred_check
      %p64 = pneg %p27
    $region23: #{tpu_custom_call.1} parent=1 // pred_check_branch
      %66 = sbr.rel (%p64) target = $region25
    $region24: #{tpu_custom_call.1} parent=1 // pred_region
      %v67 = vld [vmem:[#allocation2] sm:$0xff]
      %v68 = vld [vmem:[#allocation3] sm:$0xff]
      %v69 = vadd.f32 %v68, 1.0
      %v70 = vsub.f32 %v69, %v67
      %v71 = vadd.f32 %v67, 1e-06
      %v72 = vadd.f32 %v70, 1e-06
      %v73 = vrcp.pop %v72
      %v74 = vmul.f32 %v71, %v73
      %s75 = smul.u32 0, 8
      %v76 = vlaneseq
      %v77 = vshrl.u32 %v76, 7
      %v78 = vstv %s75
      %v79 = vadd.s32 %v78, %v77
      %vm80 = vcmp.lt.s32.totalorder %v79, 8
      %v81 = vsel %vm80, %v74, 0.0
      %v82 = vsel %vm56, %v81, 0.0
      %83 = vadd.xlane.f32.xlu0 %v82
      %v84 = vpop.xlane.xlu0 %83
      %v85 = vrot.slane %v84, 4
      %v86 = vadd.f32 %v84, %v85
      %v87 = vrot.slane %v86, 2
      %v88 = vadd.f32 %v86, %v87
      %v89 = vrot.slane %v88, 1
      %v90 = vadd.f32 %v88, %v89
      %s91 = vtos %v90
      %v92 = vstv %s91
      %93 = vst [vmem:[#allocation7] sm:$0xff] %v92
    $region25: #{tpu_custom_call.1} parent=1 // pred_fallthru
      _
    // Predicated region
    $region26: #{tpu_custom_call.1} parent=1 // pred_check
      _
    $region27: #{tpu_custom_call.1} parent=1 // pred_check_branch
      %95 = sbr.rel (0) target = $region29
    $region28: #{tpu_custom_call.1} parent=1 // pred_region
      %s97 = ssub.s32 128, 128
      %98 = vsyncadd [#allocation6], %s97
      %s100 = sshll.u32 [#allocation7], 4
      %s101 = int_to_ptr.vmem [resolvable:$true] %s100
      %103 = dma.vmem_to_hbm [thread:$0]  %s101, 128, %s3, [#allocation6]
    $region29: #{tpu_custom_call.1} parent=1 // pred_fallthru
      _
    // Predicated region
    $region30: #{tpu_custom_call.1} parent=1 // pred_check
      _
    $region31: #{tpu_custom_call.1} parent=1 // pred_check_branch
      %105 = sbr.rel (0) target = $region33
    $region32: #{tpu_custom_call.1} parent=1 // pred_region
      %106 = dma.done [#allocation6], 128
    $region33: #{tpu_custom_call.1} parent=1 // pred_fallthru
      _
    %107 = vsyncpa [#allocation5], 1
    %108 = vsyncpa [#allocation6], 1

</llo_original>
